<compile_context>
chip_gen: v5e
topology: v5e:2x2
jax: 0.10.0
libtpu: 0.0.40
codegen_flags: <defaults>
</compile_context>

<pallas_src>
import numpy as np

import jax
import jax.numpy as jnp
from jax import lax
from jax.experimental import pallas as pl
from jax.experimental.pallas import tpu as pltpu

INF = 100000000.0  # matches FCOSTargetGenerator.INF


# ----------------------------------------------------------------------------
# Pallas kernel: one grid step == (one tile of locations, one image).
# ----------------------------------------------------------------------------
def _fcos_target_kernel(loc_ref, gt_ref, out_ref):
    G = gt_ref.shape[1]            # padded number of gt boxes (sublanes)

    lx = loc_ref[0:1, :]           # (1, N)
    ly = loc_ref[1:2, :]
    lo = loc_ref[2:3, :]
    hi = loc_ref[3:4, :]

    gt = gt_ref[0]                 # (G, 8): per-gt scalar columns
    x1 = gt[:, 0:1]                # (G, 1)
    y1 = gt[:, 1:2]
    x2 = gt[:, 2:3]
    y2 = gt[:, 3:4]
    area = gt[:, 4:5]              # INF for padded gt rows
    lab_g = gt[:, 5:6]             # 0 for padded gt rows

    # l, t, r, b distances, shape (G, N) — lane-dense, implicit broadcasting.
    l = lx - x1
    t = ly - y1
    r = x2 - lx
    btm = y2 - ly

    min_ltrb = jnp.minimum(jnp.minimum(l, t), jnp.minimum(r, btm))
    max_ltrb = jnp.maximum(jnp.maximum(l, t), jnp.maximum(r, btm))
    mask = (min_ltrb > 0.0) & (max_ltrb >= lo) & (max_ltrb <= hi)

    loc2area = jnp.where(mask, area, INF)                        # (G, N)
    min_area = jnp.min(loc2area, axis=0, keepdims=True)          # (1, N)

    # First-argmin over the (small) gt sublane axis; iota stays (G, 1).
    iota_g = lax.broadcasted_iota(jnp.int32, (G, 1), 0)
    inds = jnp.min(jnp.where(loc2area == min_area, iota_g, G),
                   axis=0, keepdims=True)                        # (1, N)
    onehot = (iota_g == inds).astype(jnp.float32)                # (G, N)

    # Exact selection: onehot is exactly 0/1, so masked sublane sums are
    # bit-exact in f32 (no MXU / precision concerns).  Direct slice stores —
    # no temporary (8, N) slab, no zero rows written.
    out_ref[0, 0:1, :] = jnp.sum(onehot * l,   axis=0, keepdims=True)
    out_ref[0, 1:2, :] = jnp.sum(onehot * t,   axis=0, keepdims=True)
    out_ref[0, 2:3, :] = jnp.sum(onehot * r,   axis=0, keepdims=True)
    out_ref[0, 3:4, :] = jnp.sum(onehot * btm, axis=0, keepdims=True)
    sel_lab = jnp.sum(onehot * lab_g, axis=0, keepdims=True)
    # torch semantics: labels[locations_to_min_area == INF] = 0 (exact ==).
    out_ref[0, 4:5, :] = jnp.where(min_area == INF, 0.0, sel_lab)


def fcos_targets_pallas(loc_pack, gt_pack, tile_n, vmem_limit_bytes):
    """loc_pack: (8, N_pad) f32; gt_pack: (B, G_pad, 8) f32.
    Returns (B, 5, N_pad) f32 slab with rows [l, t, r, b, label]."""
    _, N_pad = loc_pack.shape
    B, G_pad, _ = gt_pack.shape
    nt = N_pad // tile_n

    return pl.pallas_call(
        _fcos_target_kernel,
        out_shape=jax.ShapeDtypeStruct((B, 5, N_pad), jnp.float32),
        # Batch innermost: the big location block keeps the same block index
        # across consecutive steps and is not re-DMA'd per image.
        grid=(nt, B),
        in_specs=[
            pl.BlockSpec((8, tile_n), lambda n, b: (0, n)),
            pl.BlockSpec((1, G_pad, 8), lambda n, b: (b, 0, 0)),
        ],
        out_specs=pl.BlockSpec((1, 5, tile_n), lambda n, b: (b, 0, n)),
        compiler_params=pltpu.CompilerParams(
            dimension_semantics=("parallel", "parallel"),
            vmem_limit_bytes=vmem_limit_bytes),
    )(loc_pack, gt_pack)


# ----------------------------------------------------------------------------
# Plain-JAX / numpy glue: mirrors FCOSTargetGenerator.forward
# ----------------------------------------------------------------------------
def _round_up(x, m):
    return (x + m - 1) // m * m


def fcos_target_generator_forward(all_locations, gt_boxes_list, gt_labels_list,
                                  obj_sizes_of_interest, tile_n=None,
                                  vmem_limit_bytes=None):
    """Returns (labels_level_first, reg_targets_level_first) like the torch
    module; each entry is concatenated over images for one level."""
    num_points_per_level = [int(loc.shape[0]) for loc in all_locations]
    N = sum(num_points_per_level)
    B = len(gt_boxes_list)

    if tile_n is None:
        # Large tiles amortize the ~0.35us/step overhead; per-step live set is
        # ~12 * G_pad * tile_n * 4 B, so 4096 fits comfortably in VMEM on
        # v5e/v6e/v7x for typical G_pad.  (For very small N / B on v7x, keep
        # at least 2 grid steps along a parallel axis so both TCs are used.)
        tile_n = min(4096, _round_up(N, 128))
    tile_n = max(128, _round_up(tile_n, 128))
    N_pad = _round_up(N, tile_n)

    max_gt = max([int(gb.shape[0]) for gb in gt_boxes_list] + [1])
    G_pad = _round_up(max_gt, 8)

    if vmem_limit_bytes is None:
        # Rough per-step estimate: ~14 (G,N) f32 intermediates + buffered I/O,
        # plus headroom.  Clamp to a range safe on all generations (<= 48 MiB,
        # below v7x's 64 MiB physical VMEM).
        est = (14 * G_pad * tile_n + 6 * 8 * tile_n) * 4 + (4 << 20)
        vmem_limit_bytes = int(min(max(est, 32 << 20), 48 << 20))

    # --- host-side packing in numpy: one transfer, no per-image XLA scatters.
    locs_all = np.concatenate(
        [np.asarray(l, np.float32) for l in all_locations], axis=0)   # (N, 2)
    sizes_all = np.concatenate([
        np.broadcast_to(np.asarray(s, np.float32)[None, :], (n, 2))
        for s, n in zip(obj_sizes_of_interest, num_points_per_level)], axis=0)

    loc_pack = np.zeros((8, N_pad), np.float32)
    loc_pack[0, :N] = locs_all[:, 0]
    loc_pack[1, :N] = locs_all[:, 1]
    loc_pack[2, :N] = sizes_all[:, 0]
    loc_pack[3, :N] = sizes_all[:, 1]
    loc_pack[0:2, N:] = -1.0e6        # padded locations fall outside any gt

    gt_pack = np.zeros((B, G_pad, 8), np.float32)
    gt_pack[:, :, 4] = INF            # padded gt rows: area=INF, label=0
    for i, (gb, gl) in enumerate(zip(gt_boxes_list, gt_labels_list)):
        gb = np.asarray(gb, np.float32)
        gl = np.asarray(gl, np.float32)
        g = int(gb.shape[0])
        if g == 0:
            # Zero-gt image: every location selects the padded (0,0,0,0) box;
            # labels are correctly forced to 0, reg rows are don't-care.
            continue
        gt_pack[i, :g, 0:4] = gb
        gt_pack[i, :g, 4] = (gb[:, 2] - gb[:, 0]) * (gb[:, 3] - gb[:, 1])
        gt_pack[i, :g, 5] = gl

    out = fcos_targets_pallas(jnp.asarray(loc_pack), jnp.asarray(gt_pack),
                              tile_n, vmem_limit_bytes)

    labels_out = jnp.round(out[:, 4, :N]).astype(jnp.int32)        # (B, N)
    reg_out = out[:, 0:4, :N]                                      # (B, 4, N)

    # TODO(synk): torch module also accumulates self.summary / add_summary
    # logging side effects; not reproduced here.

    # Split per level and re-order level-first (concat over images per level);
    # the transpose to (..., 4) is folded into the per-level reshape.
    labels_level_first, reg_level_first = [], []
    start = 0
    for n in num_points_per_level:
        labels_level_first.append(labels_out[:, start:start + n].reshape(-1))
        reg_level_first.append(
            jnp.transpose(reg_out[:, :, start:start + n], (0, 2, 1))
            .reshape(-1, 4))
        start += n
    return labels_level_first, reg_level_first


# ----------------------------------------------------------------------------
# Pure-JAX reference of forward_single_image (for correctness check)
# ----------------------------------------------------------------------------
def _ref_single(gt_boxes, gt_labels, locations, obj_sizes):
    lx, ly = locations[:, 0], locations[:, 1]
    l = lx[:, None] - gt_boxes[None, :, 0]
    t = ly[:, None] - gt_boxes[None, :, 1]
    r = gt_boxes[None, :, 2] - lx[:, None]
    b = gt_boxes[None, :, 3] - ly[:, None]
    reg = jnp.stack([l, t, r, b], axis=2)
    is_in = reg.min(axis=2) > 0
    mx = reg.max(axis=2)
    cared = (mx >= obj_sizes[:, 0:1]) & (mx <= obj_sizes[:, 1:2])
    area = (gt_boxes[:, 2] - gt_boxes[:, 0]) * (gt_boxes[:, 3] - gt_boxes[:, 1])
    l2a = jnp.broadcast_to(area[None], is_in.shape)
    l2a = jnp.where(is_in, l2a, INF)
    l2a = jnp.where(cared, l2a, INF)
    min_area = l2a.min(axis=1)
    inds = jnp.argmin(l2a, axis=1)
    reg_sel = reg[jnp.arange(locations.shape[0]), inds]
    labels = gt_labels[inds]
    labels = jnp.where(min_area == INF, 0, labels)
    return labels, reg_sel


def _compute_locations(h, w, stride):
    xs = (jnp.arange(w, dtype=jnp.float32) + 0.5) * stride
    ys = (jnp.arange(h, dtype=jnp.float32) + 0.5) * stride
    yy, xx = jnp.meshgrid(ys, xs, indexing="ij")
    return jnp.stack([xx.reshape(-1), yy.reshape(-1)], axis=1)


if __name__ == "__main__":
    key = jax.random.PRNGKey(0)

    # two FPN levels on a 128x128 image: 16x16 (stride 8) and 8x8 (stride 16)
    all_locations = [_compute_locations(16, 16, 8),
                     _compute_locations(8, 8, 16)]
    obj_sizes_of_interest = [[-1.0, 32.0], [32.0, INF]]

    # batch of 2 images with 3 and 5 gt boxes (integer coords)
    num_gt = [3, 5]
    gt_boxes_list, gt_labels_list = [], []
    for g in num_gt:
        key, k1, k2, k3 = jax.random.split(key, 4)
        xy = jax.random.randint(k1, (g, 2), 0, 80).astype(jnp.float32)
        wh = jax.random.randint(k2, (g, 2), 8, 56).astype(jnp.float32)
        gt_boxes_list.append(jnp.concatenate([xy, xy + wh], axis=1))
        gt_labels_list.append(jax.random.randint(k3, (g,), 1, 6, jnp.int32))

    # small tile to exercise the multi-tile (N-tile, B) grid path
    labels_lf, reg_lf = fcos_target_generator_forward(
        all_locations, gt_boxes_list, gt_labels_list, obj_sizes_of_interest,
        tile_n=128)
    jax.block_until_ready(labels_lf)
    jax.block_until_ready(reg_lf)

    # reference check against a pure-JAX mirror of forward_single_image
    num_points = [loc.shape[0] for loc in all_locations]
    locs_all = jnp.concatenate(all_locations, axis=0)
    sizes_all = jnp.concatenate([
        jnp.broadcast_to(jnp.asarray(s, jnp.float32)[None, :], (n, 2))
        for s, n in zip(obj_sizes_of_interest, num_points)], axis=0)
    ref_labels, ref_regs = [], []
    for gb, gl in zip(gt_boxes_list, gt_labels_list):
        lab, rg = _ref_single(gb, gl, locs_all, sizes_all)
        ref_labels.append(lab)
        ref_regs.append(rg)
    start = 0
    ok = True
    for lvl, n in enumerate(num_points):
        ref_lab_lvl = jnp.concatenate([l[start:start + n] for l in ref_labels])
        ref_reg_lvl = jnp.concatenate([r[start:start + n] for r in ref_regs])
        ok &= bool(jnp.all(labels_lf[lvl] == ref_lab_lvl))
        ok &= bool(jnp.allclose(reg_lf[lvl], ref_reg_lvl, atol=1e-4))
        start += n

    if ok:
        print("KERNEL_OK")
    else:
        print("MISMATCH")
</pallas_src>

<mosaic_0001>
module attributes {stable_mosaic.version = 11 : i64} {
  func.func @_fcos_target_kernel(%arg0: i32, %arg1: i32, %arg2: memref<8x128xf32, #tpu.memory_space<vmem>>, %arg3: memref<1x8x8xf32, #tpu.memory_space<vmem>>, %arg4: memref<1x5x128xf32, #tpu.memory_space<vmem>>) attributes {dimension_semantics = [#tpu.dimension_semantics<parallel>, #tpu.dimension_semantics<parallel>], iteration_bounds = array<i64: 3, 2>, scalar_prefetch = 0 : i64, scratch_operands = 0 : i64, tpu.core_type = #tpu.core_type<tc>, window_params = [{transform_indices = @transform_0, window_bounds = array<i64: 8, 128>}, {transform_indices = @transform_1, window_bounds = array<i64: 1, 8, 8>}, {transform_indices = @transform_2, window_bounds = array<i64: 1, 5, 128>}]} {
    %c0 = arith.constant 0 : index
    %c0_0 = arith.constant 0 : index
    %0 = vector.load %arg2[%c0, %c0_0] : memref<8x128xf32, #tpu.memory_space<vmem>>, vector<1x128xf32>
    %c1 = arith.constant 1 : index
    %c0_1 = arith.constant 0 : index
    %1 = vector.load %arg2[%c1, %c0_1] : memref<8x128xf32, #tpu.memory_space<vmem>>, vector<1x128xf32>
    %c2 = arith.constant 2 : index
    %c0_2 = arith.constant 0 : index
    %2 = vector.load %arg2[%c2, %c0_2] : memref<8x128xf32, #tpu.memory_space<vmem>>, vector<1x128xf32>
    %c3 = arith.constant 3 : index
    %c0_3 = arith.constant 0 : index
    %3 = vector.load %arg2[%c3, %c0_3] : memref<8x128xf32, #tpu.memory_space<vmem>>, vector<1x128xf32>
    %c0_4 = arith.constant 0 : index
    %c0_5 = arith.constant 0 : index
    %c0_6 = arith.constant 0 : index
    %4 = vector.load %arg3[%c0_4, %c0_5, %c0_6] : memref<1x8x8xf32, #tpu.memory_space<vmem>>, vector<1x8x8xf32>
    %5 = vector.shape_cast %4 : vector<1x8x8xf32> to vector<8x8xf32>
    %6 = vector.extract_strided_slice %5 {offsets = [0, 0], sizes = [8, 1], strides = [1, 1]} : vector<8x8xf32> to vector<8x1xf32>
    %7 = vector.extract_strided_slice %5 {offsets = [0, 1], sizes = [8, 1], strides = [1, 1]} : vector<8x8xf32> to vector<8x1xf32>
    %8 = vector.extract_strided_slice %5 {offsets = [0, 2], sizes = [8, 1], strides = [1, 1]} : vector<8x8xf32> to vector<8x1xf32>
    %9 = vector.extract_strided_slice %5 {offsets = [0, 3], sizes = [8, 1], strides = [1, 1]} : vector<8x8xf32> to vector<8x1xf32>
    %10 = vector.extract_strided_slice %5 {offsets = [0, 4], sizes = [8, 1], strides = [1, 1]} : vector<8x8xf32> to vector<8x1xf32>
    %11 = vector.extract_strided_slice %5 {offsets = [0, 5], sizes = [8, 1], strides = [1, 1]} : vector<8x8xf32> to vector<8x1xf32>
    %12 = vector.broadcast %0 : vector<1x128xf32> to vector<8x128xf32>
    %13 = vector.broadcast %6 : vector<8x1xf32> to vector<8x128xf32>
    %14 = arith.subf %12, %13 : vector<8x128xf32>
    %15 = vector.broadcast %1 : vector<1x128xf32> to vector<8x128xf32>
    %16 = vector.broadcast %7 : vector<8x1xf32> to vector<8x128xf32>
    %17 = arith.subf %15, %16 : vector<8x128xf32>
    %18 = vector.broadcast %8 : vector<8x1xf32> to vector<8x128xf32>
    %19 = vector.broadcast %0 : vector<1x128xf32> to vector<8x128xf32>
    %20 = arith.subf %18, %19 : vector<8x128xf32>
    %21 = vector.broadcast %9 : vector<8x1xf32> to vector<8x128xf32>
    %22 = vector.broadcast %1 : vector<1x128xf32> to vector<8x128xf32>
    %23 = arith.subf %21, %22 : vector<8x128xf32>
    %24 = arith.minimumf %14, %17 : vector<8x128xf32>
    %25 = arith.minimumf %20, %23 : vector<8x128xf32>
    %26 = arith.minimumf %24, %25 : vector<8x128xf32>
    %27 = arith.maximumf %14, %17 : vector<8x128xf32>
    %28 = arith.maximumf %20, %23 : vector<8x128xf32>
    %29 = arith.maximumf %27, %28 : vector<8x128xf32>
    %cst = arith.constant 0.000000e+00 : f32
    %30 = vector.broadcast %cst : f32 to vector<8x128xf32>
    %31 = arith.cmpf ogt, %26, %30 : vector<8x128xf32>
    %32 = vector.broadcast %2 : vector<1x128xf32> to vector<8x128xf32>
    %33 = arith.cmpf oge, %29, %32 : vector<8x128xf32>
    %34 = arith.andi %31, %33 : vector<8x128xi1>
    %35 = vector.broadcast %3 : vector<1x128xf32> to vector<8x128xf32>
    %36 = arith.cmpf ole, %29, %35 : vector<8x128xf32>
    %37 = arith.andi %34, %36 : vector<8x128xi1>
    %cst_7 = arith.constant 1.000000e+08 : f32
    %38 = vector.shape_cast %10 : vector<8x1xf32> to vector<8x1xf32>
    %39 = vector.broadcast %38 : vector<8x1xf32> to vector<8x128xf32>
    %40 = vector.broadcast %cst_7 : f32 to vector<8x128xf32>
    %41 = arith.select %37, %39, %40 : vector<8x128xi1>, vector<8x128xf32>
    %cst_8 = arith.constant dense<0x7F800000> : vector<128xf32>
    %42 = vector.multi_reduction <minimumf>, %41, %cst_8 [0] : vector<8x128xf32> to vector<128xf32>
    %43 = vector.shape_cast %42 : vector<128xf32> to vector<1x128xf32>
    %44 = tpu.iota {dimensions = array<i32: 0>} : vector<8x1xi32>
    %45 = vector.broadcast %43 : vector<1x128xf32> to vector<8x128xf32>
    %46 = arith.cmpf oeq, %41, %45 : vector<8x128xf32>
    %c8_i32 = arith.constant 8 : i32
    %47 = vector.shape_cast %44 : vector<8x1xi32> to vector<8x1xi32>
    %48 = vector.broadcast %47 : vector<8x1xi32> to vector<8x128xi32>
    %49 = vector.broadcast %c8_i32 : i32 to vector<8x128xi32>
    %50 = arith.select %46, %48, %49 : vector<8x128xi1>, vector<8x128xi32>
    %cst_9 = arith.constant dense<2147483647> : vector<128xi32>
    %51 = vector.multi_reduction <minsi>, %50, %cst_9 [0] : vector<8x128xi32> to vector<128xi32>
    %52 = vector.shape_cast %51 : vector<128xi32> to vector<1x128xi32>
    %53 = vector.broadcast %44 : vector<8x1xi32> to vector<8x128xi32>
    %54 = vector.broadcast %52 : vector<1x128xi32> to vector<8x128xi32>
    %55 = arith.cmpi eq, %53, %54 : vector<8x128xi32>
    %56 = arith.extui %55 : vector<8x128xi1> to vector<8x128xi32>
    %57 = arith.sitofp %56 : vector<8x128xi32> to vector<8x128xf32>
    %58 = arith.mulf %57, %14 : vector<8x128xf32>
    %cst_10 = arith.constant dense<0.000000e+00> : vector<128xf32>
    %59 = vector.multi_reduction <add>, %58, %cst_10 [0] : vector<8x128xf32> to vector<128xf32>
    %60 = vector.shape_cast %59 : vector<128xf32> to vector<1x128xf32>
    %c0_11 = arith.constant 0 : index
    %c0_12 = arith.constant 0 : index
    %c0_13 = arith.constant 0 : index
    %61 = vector.load %arg4[%c0_11, %c0_12, %c0_13] : memref<1x5x128xf32, #tpu.memory_space<vmem>>, vector<1x1x128xf32>
    %62 = vector.shape_cast %61 : vector<1x1x128xf32> to vector<1x128xf32>
    %63 = vector.shape_cast %60 : vector<1x128xf32> to vector<1x1x128xf32>
    tpu.vector_store %arg4[%c0_11, %c0_12, %c0_13], %63 {strides = array<i32>} : memref<1x5x128xf32, #tpu.memory_space<vmem>>, vector<1x1x128xf32>,
    %64 = arith.mulf %57, %17 : vector<8x128xf32>
    %cst_14 = arith.constant dense<0.000000e+00> : vector<128xf32>
    %65 = vector.multi_reduction <add>, %64, %cst_14 [0] : vector<8x128xf32> to vector<128xf32>
    %66 = vector.shape_cast %65 : vector<128xf32> to vector<1x128xf32>
    %c0_15 = arith.constant 0 : index
    %c1_16 = arith.constant 1 : index
    %c0_17 = arith.constant 0 : index
    %67 = vector.load %arg4[%c0_15, %c1_16, %c0_17] : memref<1x5x128xf32, #tpu.memory_space<vmem>>, vector<1x1x128xf32>
    %68 = vector.shape_cast %67 : vector<1x1x128xf32> to vector<1x128xf32>
    %69 = vector.shape_cast %66 : vector<1x128xf32> to vector<1x1x128xf32>
    tpu.vector_store %arg4[%c0_15, %c1_16, %c0_17], %69 {strides = array<i32>} : memref<1x5x128xf32, #tpu.memory_space<vmem>>, vector<1x1x128xf32>,
    %70 = arith.mulf %57, %20 : vector<8x128xf32>
    %cst_18 = arith.constant dense<0.000000e+00> : vector<128xf32>
    %71 = vector.multi_reduction <add>, %70, %cst_18 [0] : vector<8x128xf32> to vector<128xf32>
    %72 = vector.shape_cast %71 : vector<128xf32> to vector<1x128xf32>
    %c0_19 = arith.constant 0 : index
    %c2_20 = arith.constant 2 : index
    %c0_21 = arith.constant 0 : index
    %73 = vector.load %arg4[%c0_19, %c2_20, %c0_21] : memref<1x5x128xf32, #tpu.memory_space<vmem>>, vector<1x1x128xf32>
    %74 = vector.shape_cast %73 : vector<1x1x128xf32> to vector<1x128xf32>
    %75 = vector.shape_cast %72 : vector<1x128xf32> to vector<1x1x128xf32>
    tpu.vector_store %arg4[%c0_19, %c2_20, %c0_21], %75 {strides = array<i32>} : memref<1x5x128xf32, #tpu.memory_space<vmem>>, vector<1x1x128xf32>,
    %76 = arith.mulf %57, %23 : vector<8x128xf32>
    %cst_22 = arith.constant dense<0.000000e+00> : vector<128xf32>
    %77 = vector.multi_reduction <add>, %76, %cst_22 [0] : vector<8x128xf32> to vector<128xf32>
    %78 = vector.shape_cast %77 : vector<128xf32> to vector<1x128xf32>
    %c0_23 = arith.constant 0 : index
    %c3_24 = arith.constant 3 : index
    %c0_25 = arith.constant 0 : index
    %79 = vector.load %arg4[%c0_23, %c3_24, %c0_25] : memref<1x5x128xf32, #tpu.memory_space<vmem>>, vector<1x1x128xf32>
    %80 = vector.shape_cast %79 : vector<1x1x128xf32> to vector<1x128xf32>
    %81 = vector.shape_cast %78 : vector<1x128xf32> to vector<1x1x128xf32>
    tpu.vector_store %arg4[%c0_23, %c3_24, %c0_25], %81 {strides = array<i32>} : memref<1x5x128xf32, #tpu.memory_space<vmem>>, vector<1x1x128xf32>,
    %82 = vector.broadcast %11 : vector<8x1xf32> to vector<8x128xf32>
    %83 = arith.mulf %57, %82 : vector<8x128xf32>
    %cst_26 = arith.constant dense<0.000000e+00> : vector<128xf32>
    %84 = vector.multi_reduction <add>, %83, %cst_26 [0] : vector<8x128xf32> to vector<128xf32>
    %85 = vector.shape_cast %84 : vector<128xf32> to vector<1x128xf32>
    %cst_27 = arith.constant 1.000000e+08 : f32
    %86 = vector.broadcast %cst_27 : f32 to vector<1x128xf32>
    %87 = arith.cmpf oeq, %43, %86 : vector<1x128xf32>
    %cst_28 = arith.constant 0.000000e+00 : f32
    %88 = vector.broadcast %cst_28 : f32 to vector<1x128xf32>
    %89 = arith.select %87, %88, %85 : vector<1x128xi1>, vector<1x128xf32>
    %c0_29 = arith.constant 0 : index
    %c4 = arith.constant 4 : index
    %c0_30 = arith.constant 0 : index
    %90 = vector.load %arg4[%c0_29, %c4, %c0_30] : memref<1x5x128xf32, #tpu.memory_space<vmem>>, vector<1x1x128xf32>
    %91 = vector.shape_cast %90 : vector<1x1x128xf32> to vector<1x128xf32>
    %92 = vector.shape_cast %89 : vector<1x128xf32> to vector<1x1x128xf32>
    tpu.vector_store %arg4[%c0_29, %c4, %c0_30], %92 {strides = array<i32>} : memref<1x5x128xf32, #tpu.memory_space<vmem>>, vector<1x1x128xf32>,
    return
  }
  func.func @transform_0(%arg0: i32, %arg1: i32) -> (i32, i32) {
    %c0_i32 = arith.constant 0 : i32
    %c0_i32_0 = arith.constant 0 : i32
    return %c0_i32, %arg0 : i32, i32
  }
  func.func @transform_1(%arg0: i32, %arg1: i32) -> (i32, i32, i32) {
    %c0_i32 = arith.constant 0 : i32
    %c0_i32_0 = arith.constant 0 : i32
    %c0_i32_1 = arith.constant 0 : i32
    return %arg1, %c0_i32, %c0_i32_0 : i32, i32, i32
  }
  func.func @transform_2(%arg0: i32, %arg1: i32) -> (i32, i32, i32) {
    %c0_i32 = arith.constant 0 : i32
    %c0_i32_0 = arith.constant 0 : i32
    return %arg1, %c0_i32, %arg0 : i32, i32, i32
  }
}

</mosaic_0001>

<llo_original>
// kernel: tpu_custom_call.1
$region0: #{tpu_custom_call.1}
  #allocation0 [shape = 'u32[]', space=smem, size = 0x4, offset = 0x4, fixed_abs, tag = 'smem constant byte address 0x4 - core index']
  #allocation1 [shape = 'u32[72,128]{1,0:T(1,128)}', space=vmem, size = 0x9000, scoped, tag = 'internal scratch']
  %s0 = inlined_call_operand.hbm [shape: f32[8,384], index: 0, kind: input, shape index: {}]
  %s1 = inlined_call_operand.hbm [shape: f32[2,8,8], index: 1, kind: input, shape index: {}]
  %s2 = inlined_call_operand.vmem [shape: f32[2,5,384], index: 2, kind: output, shape index: {}]
  %s3 = sld [smem:[#allocation0]]
  $region49: #{tpu_custom_call.1} parent=0
    _
  %s5 = ssub.s32 1, %s3
  %s6 = scalar_select 0, %s5, %s3
  $region1: #{tpu_custom_call.1} parent=0
    #allocation2 [shape = 'u8[8192]{0}', space=vmem, size = 0x2000, scoped, tag = 'input window, operand 0']
    #allocation3 [shape = 's32[2]{0}', space=sflag, size = 0x8, scoped, tag = 'scoped memory for tpu_custom_call.1']
    #allocation4 [shape = 'u8[8192]{0}', space=vmem, size = 0x2000, scoped, tag = 'input window, operand 1']
    #allocation5 [shape = 's32[2]{0}', space=sflag, size = 0x8, scoped, tag = 'scoped memory for tpu_custom_call.1']
    %7 = vsyncpa [#allocation3], 0
    %s8 = scalar_lea.sflag [#allocation3], 1
    %9 = vsyncpa %s8, 0
    %10 = vsyncpa [#allocation5], 0
    %s11 = scalar_lea.sflag [#allocation5], 1
    %12 = vsyncpa %s11, 0
    loop: start=0, step=1, limit=8
    $region2: #{tpu_custom_call.1} parent=1 // loop_pre_header
      _
    $region3: #{tpu_custom_call.1} parent=1 // loop_header
      %s14 = sphi 0, %s18
      %p15 = scmp.ge.s32.totalorder %s14, 8
      %s21 = sphi 0, %s33
      %s22 = sphi 0, %s29
      %s23 = sphi 0, %s21
      %s24 = sphi 0, %s22
      %s25 = sphi 0, %s23
      %s26 = sphi 0, %s24
      %s36 = sphi 0, %s38
      %s39 = sphi 0, %s36
      %s40 = sphi 0, %s39
      %s56 = sphi 0, %s40
      %s62 = sphi 0, %s64
      %s65 = sphi 0, %s62
      %s66 = sphi 0, %s65
      %s82 = sphi 0, %s66
      %s90 = sphi 0, %s92
      %s93 = sphi 0, %s90
      %s94 = sphi 0, %s93
      %s110 = sphi 0, %s94
    $region4: #{tpu_custom_call.1} parent=1 // loop_header_branch
      %17 = sbr.rel (%p15) target = $region8
    $region5: #{tpu_custom_call.1} parent=1 // loop_body
      %s19 = ssub.s32 %s14, 1
      %s20 = ssub.s32 %s14, 2
      %s27 = sadd.s32 1, %s22
      %p28 = scmp.ge.s32.totalorder %s27, 2
      %s29 = scalar_select %p28, 0, %s27
      %s30 = sadd.s32 1, %s21
      %s31 = scalar_select %p28, %s30, %s21
      %p32 = scmp.ge.s32.totalorder %s31, 3
      %s33 = scalar_select %p32, 0, %s31
      %s34 = ssub.s32 %s21, %s33
      %p35 = scmp.eq.s32.totalorder %s34, 0
      %s37 = sadd.s32 %s36, 1
      %s38 = scalar_select %p35, %s36, %s37
      %p41 = pneg %p35
      %p42 = scmp.eq.s32.totalorder %s14, 5
      %p43 = por %p41, %p42
      %p44 = scmp.ne.s32.totalorder %s36, %s39
      %p45 = scmp.eq.s32.totalorder %s14, 0
      %p46 = por %p44, %p45
      %p47 = scmp.ne.s32.totalorder %s36, %s39
      %p48 = scmp.eq.s32.totalorder %s19, 5
      %p49 = por %p47, %p48
      %p50 = scmp.ne.s32.totalorder %s39, %s40
      %p51 = scmp.eq.s32.totalorder %s19, 0
      %p52 = por %p50, %p51
      %p53 = scmp.ne.s32.totalorder %s39, %s40
      %p54 = scmp.eq.s32.totalorder %s20, 5
      %p55 = por %p53, %p54
      %p57 = scmp.ne.s32.totalorder %s40, %s56
      %p58 = scmp.eq.s32.totalorder %s20, 0
      %p59 = por %p57, %p58
      %s60 = ssub.s32 %s22, %s29
      %p61 = scmp.eq.s32.totalorder %s60, 0
      %s63 = sadd.s32 %s62, 1
      %s64 = scalar_select %p61, %s62, %s63
      %p67 = pneg %p61
      %p68 = scmp.eq.s32.totalorder %s14, 5
      %p69 = por %p67, %p68
      %p70 = scmp.ne.s32.totalorder %s62, %s65
      %p71 = scmp.eq.s32.totalorder %s14, 0
      %p72 = por %p70, %p71
      %p73 = scmp.ne.s32.totalorder %s62, %s65
      %p74 = scmp.eq.s32.totalorder %s19, 5
      %p75 = por %p73, %p74
      %p76 = scmp.ne.s32.totalorder %s65, %s66
      %p77 = scmp.eq.s32.totalorder %s19, 0
      %p78 = por %p76, %p77
      %p79 = scmp.ne.s32.totalorder %s65, %s66
      %p80 = scmp.eq.s32.totalorder %s20, 5
      %p81 = por %p79, %p80
      %p83 = scmp.ne.s32.totalorder %s66, %s82
      %p84 = scmp.eq.s32.totalorder %s20, 0
      %p85 = por %p83, %p84
      %s86 = ssub.s32 %s22, %s29
      %s87 = ssub.s32 %s21, %s33
      %s88 = sor.u32 %s86, %s87
      %p89 = scmp.eq.s32.totalorder %s88, 0
      %s91 = sadd.s32 %s90, 1
      %s92 = scalar_select %p89, %s90, %s91
      %p95 = pneg %p89
      %p96 = scmp.eq.s32.totalorder %s14, 5
      %p97 = por %p95, %p96
      %p98 = scmp.ne.s32.totalorder %s90, %s93
      %p99 = scmp.eq.s32.totalorder %s14, 0
      %p100 = por %p98, %p99
      %p101 = scmp.ne.s32.totalorder %s90, %s93
      %p102 = scmp.eq.s32.totalorder %s19, 5
      %p103 = por %p101, %p102
      %p104 = scmp.ne.s32.totalorder %s93, %s94
      %p105 = scmp.eq.s32.totalorder %s19, 0
      %p106 = por %p104, %p105
      %p107 = scmp.ne.s32.totalorder %s93, %s94
      %p108 = scmp.eq.s32.totalorder %s20, 5
      %p109 = por %p107, %p108
      %p111 = scmp.ne.s32.totalorder %s94, %s110
      %p112 = scmp.eq.s32.totalorder %s20, 0
      %p113 = por %p111, %p112
      %p114 = scmp.le.s32.totalorder 1, %s14
      %p115 = scmp.lt.s32.totalorder %s14, 7
      %p116 = pnand %p114, %p115
      %p117 = pneg %p116
      // Predicated region
      $region9: #{tpu_custom_call.1} parent=5 // pred_check
        _
      $region10: #{tpu_custom_call.1} parent=5 // pred_check_branch
        %119 = sbr.rel (%p116) target = $region12
      $region11: #{tpu_custom_call.1} parent=5 // pred_region
        %s120 = ssub.s32 %s14, 1
      $region12: #{tpu_custom_call.1} parent=5 // pred_fallthru
        _
      %p121 = scmp.lt.s32.totalorder %s14, 6
      // Predicated region
      $region13: #{tpu_custom_call.1} parent=5 // pred_check
        %p122 = pneg %p121
      $region14: #{tpu_custom_call.1} parent=5 // pred_check_branch
        %124 = sbr.rel (%p122) target = $region16
      $region15: #{tpu_custom_call.1} parent=5 // pred_region
        // Predicated region
        $region17: #{tpu_custom_call.1} parent=15 // pred_check
          %p125 = pneg %p46
        $region18: #{tpu_custom_call.1} parent=15 // pred_check_branch
          %127 = sbr.rel (%p125) target = $region20
        $region19: #{tpu_custom_call.1} parent=15 // pred_region
          %s128 = sand.u32 %s36, 1
          %s129 = scalar_lea.sflag [#allocation3], %s128
          %s130 = sand.u32 %s36, 1
          %s131 = smul.addr %s130, 8
          %s132 = scalar_lea.vmem [#allocation2], %s131
          %134 = vsyncadd %s129, 0
          %s135 = smul.addr %s21, 8
          %s136 = scalar_lea.hbm %s0, %s135
          %s138 = sshll.u32 %s136, 4
          %s139 = int_to_ptr.hbm [resolvable:$true] %s138
          %s140 = sshll.u32 %s132, 4
          %s141 = int_to_ptr.vmem [resolvable:$true] %s140
          %143 = dma.hbm_to_vmem [thread:$0]  %s139, 128, %s141, %s129
        $region20: #{tpu_custom_call.1} parent=15 // pred_fallthru
          _
        // Predicated region
        $region21: #{tpu_custom_call.1} parent=15 // pred_check
          %p144 = pneg %p72
        $region22: #{tpu_custom_call.1} parent=15 // pred_check_branch
          %146 = sbr.rel (%p144) target = $region24
        $region23: #{tpu_custom_call.1} parent=15 // pred_region
          %s147 = sand.u32 %s62, 1
          %s148 = scalar_lea.sflag [#allocation5], %s147
          %s149 = sand.u32 %s62, 1
          %s150 = smul.addr %s149, 8
          %s151 = scalar_lea.vmem [#allocation4], %s150
          %153 = vsyncadd %s148, 0
          %s154 = smul.addr %s22, 8
          %s155 = scalar_lea.hbm %s1, %s154
          %s157 = sshll.u32 %s155, 4
          %s158 = int_to_ptr.hbm [resolvable:$true] %s157
          %s159 = sshll.u32 %s151, 4
          %s160 = int_to_ptr.vmem [resolvable:$true] %s159
          %162 = dma.hbm_to_vmem [thread:$0]  %s158, 128, %s160, %s148
        $region24: #{tpu_custom_call.1} parent=15 // pred_fallthru
          _
      $region16: #{tpu_custom_call.1} parent=5 // pred_fallthru
        _
      %p163 = scmp.le.s32.totalorder 1, %s14
      %p164 = scmp.lt.s32.totalorder %s14, 7
      %p165 = pnand %p163, %p164
      %p166 = pneg %p165
      // Predicated region
      $region25: #{tpu_custom_call.1} parent=5 // pred_check
        _
      $region26: #{tpu_custom_call.1} parent=5 // pred_check_branch
        %168 = sbr.rel (%p165) target = $region28
      $region27: #{tpu_custom_call.1} parent=5 // pred_region
        %s169 = ssub.s32 %s14, 1
        %s170 = sand.u32 %s39, 1
        %s171 = scalar_lea.sflag [#allocation3], %s170
        %s172 = sand.u32 %s39, 1
        %s173 = smul.addr %s172, 8
        %s174 = scalar_lea.vmem [#allocation2], %s173
        // Predicated region
        $region29: #{tpu_custom_call.1} parent=27 // pred_check
          %p175 = pneg %p52
        $region30: #{tpu_custom_call.1} parent=27 // pred_check_branch
          %177 = sbr.rel (%p175) target = $region32
        $region31: #{tpu_custom_call.1} parent=27 // pred_region
          %179 = dma.done %s171, 128
        $region32: #{tpu_custom_call.1} parent=27 // pred_fallthru
          _
        %s180 = sand.u32 %s65, 1
        %s181 = scalar_lea.sflag [#allocation5], %s180
        %s182 = sand.u32 %s65, 1
        %s183 = smul.addr %s182, 8
        %s184 = scalar_lea.vmem [#allocation4], %s183
        // Predicated region
        $region33: #{tpu_custom_call.1} parent=27 // pred_check
          %p185 = pneg %p78
        $region34: #{tpu_custom_call.1} parent=27 // pred_check_branch
          %187 = sbr.rel (%p185) target = $region36
        $region35: #{tpu_custom_call.1} parent=27 // pred_region
          %189 = dma.done %s181, 128
        $region36: #{tpu_custom_call.1} parent=27 // pred_fallthru
          _
        %s190 = sand.u32 %s39, 1
        %s191 = scalar_lea.sflag [#allocation3], %s190
        %s192 = sand.u32 %s39, 1
        %s193 = smul.addr %s192, 8
        %s194 = scalar_lea.vmem [#allocation2], %s193
        %p195 = pneg %p52
        %p196 = pneg %p49
        %s197 = sand.u32 %s65, 1
        %s198 = scalar_lea.sflag [#allocation5], %s197
        %s199 = sand.u32 %s65, 1
        %s200 = smul.addr %s199, 8
        %s201 = scalar_lea.vmem [#allocation4], %s200
        %p202 = pneg %p78
        %p203 = pneg %p75
        %p204 = pneg %p106
        %p205 = pneg %p103
        %p206 = scmp.lt.s32.totalorder %s24, 1
        %s207 = scalar_select %p206, %s24, 1
        %p208 = scmp.lt.s32.totalorder %s23, 2
        %s209 = scalar_select %p208, %s23, 2
        %s210 = smul.addr %s207, 3
        %s211 = sadd.s32 %s209, %s210
        %s212 = smul.addr %s211, 8
        %s213 = scalar_lea.vmem %s2, %s212
        %p214 = scmp.lt.s32.totalorder %s24, 1
        %s215 = scalar_select %p214, %s24, 1
        %p216 = scmp.lt.s32.totalorder %s23, 2
        %s217 = scalar_select %p216, %s23, 2
        %s218 = smul.addr %s215, 3
        %s219 = sadd.s32 %s217, %s218
        %s220 = smul.addr %s219, 8
        %s221 = scalar_lea.vmem %s2, %s220
        %v222 = vld [vmem:[%s174] sm:$0x1]
        %v223 = vld [vmem:[%s174 + $0x1] sm:$0x1]
        %v224 = vld [vmem:[%s174 + $0x2] sm:$0x1]
        %v225 = vld [vmem:[%s174 + $0x3] sm:$0x1]
        %v226 = vld [vmem:[%s184] sm:$0xff]
        %v227 = vperm.slane %v222, 0
        %229 = vset.pattern.permute.xlu0 0
        %230 = vperm.xlu0 %229, %v226
        %v231 = vpop.permute.xlu0 %230
        %v233 = vsub.f32 %v227, %v231
        %v234 = vperm.slane %v223, 0
        %235 = vset.pattern.permute.xlu0 1
        %236 = vperm.xlu0 %235, %v226
        %v237 = vpop.permute.xlu0 %236
        %v239 = vsub.f32 %v234, %v237
        %240 = vset.pattern.permute.xlu0 2
        %241 = vperm.xlu0 %240, %v226
        %v242 = vpop.permute.xlu0 %241
        %v244 = vsub.f32 %v242, %v227
        %245 = vset.pattern.permute.xlu0 3
        %246 = vperm.xlu0 %245, %v226
        %v247 = vpop.permute.xlu0 %246
        %v249 = vsub.f32 %v247, %v234
        %v250 = vmin.f32 %v233, %v239
        %v251 = vmin.f32 %v244, %v249
        %v252 = vmin.f32 %v250, %v251
        %v253 = vmax.f32 %v233, %v239
        %v254 = vmax.f32 %v244, %v249
        %v255 = vmax.f32 %v253, %v254
        %vm256 = vcmp.gt.f32.partialorder %v252, 0.0
        %v257 = vperm.slane %v224, 0
        %vm258 = vcmp.ge.f32.partialorder %v255, %v257
        %vm259 = vmand %vm256, %vm258
        %v260 = vperm.slane %v225, 0
        %vm261 = vcmp.le.f32.partialorder %v255, %v260
        %vm262 = vmand %vm259, %vm261
        %263 = vset.pattern.permute.xlu0 4
        %264 = vperm.xlu0 %263, %v226
        %v265 = vpop.permute.xlu0 %264
        %v267 = vsel %vm262, %v265, 1e+08
        %v268 = vrot.slane %v267, 4
        %v269 = vmin.f32 %v267, %v268
        %v270 = vrot.slane %v269, 2
        %v271 = vmin.f32 %v269, %v270
        %v272 = vrot.slane %v271, 1
        %v273 = vmin.f32 %v271, %v272
        %v274 = vlaneseq
        %v275 = vshrl.u32 %v274, 7
        %vm276 = vcmp.eq.f32.partialorder %v267, %v273
        %v277 = vsel %vm276, %v275, 8
        %v278 = vrot.slane %v277, 4
        %vm279 = vcmp.lt.s32.totalorder %v277, %v278
        %v280 = vsel %vm279, %v277, %v278
        %v281 = vrot.slane %v280, 2
        %vm282 = vcmp.lt.s32.totalorder %v280, %v281
        %v283 = vsel %vm282, %v280, %v281
        %v284 = vrot.slane %v283, 1
        %vm285 = vcmp.lt.s32.totalorder %v283, %v284
        %v286 = vsel %vm285, %v283, %v284
        %vm287 = vcmp.eq.s32.totalorder %v275, %v286
        %v288 = vsel %vm287, 1, 0
        %v289 = vcvt.s32.f32 %v288
        %v290 = vmul.f32 %v289, %v233
        %v291 = vrot.slane %v290, 4
        %v292 = vadd.f32 %v290, %v291
        %v293 = vrot.slane %v292, 2
        %v294 = vadd.f32 %v292, %v293
        %v295 = vrot.slane %v294, 1
        %v296 = vadd.f32 %v294, %v295
        %297 = vst [vmem:[%s221] sm:$0x1] %v296
        %v298 = vmul.f32 %v289, %v239
        %v299 = vrot.slane %v298, 4
        %v300 = vadd.f32 %v298, %v299
        %v301 = vrot.slane %v300, 2
        %v302 = vadd.f32 %v300, %v301
        %v303 = vrot.slane %v302, 1
        %v304 = vadd.f32 %v302, %v303
        %305 = vst [vmem:[%s221 + $0x1] sm:$0x1] %v304
        %v306 = vmul.f32 %v289, %v244
        %v307 = vrot.slane %v306, 4
        %v308 = vadd.f32 %v306, %v307
        %v309 = vrot.slane %v308, 2
        %v310 = vadd.f32 %v308, %v309
        %v311 = vrot.slane %v310, 1
        %v312 = vadd.f32 %v310, %v311
        %313 = vst [vmem:[%s221 + $0x2] sm:$0x1] %v312
        %v314 = vmul.f32 %v289, %v249
        %v315 = vrot.slane %v314, 4
        %v316 = vadd.f32 %v314, %v315
        %v317 = vrot.slane %v316, 2
        %v318 = vadd.f32 %v316, %v317
        %v319 = vrot.slane %v318, 1
        %v320 = vadd.f32 %v318, %v319
        %321 = vst [vmem:[%s221 + $0x3] sm:$0x1] %v320
        %322 = vset.pattern.permute.xlu0 5
        %323 = vperm.xlu0 %322, %v226
        %v324 = vpop.permute.xlu0 %323
        %v326 = vmul.f32 %v289, %v324
        %v327 = vrot.slane %v326, 4
        %v328 = vadd.f32 %v326, %v327
        %v329 = vrot.slane %v328, 2
        %v330 = vadd.f32 %v328, %v329
        %v331 = vrot.slane %v330, 1
        %v332 = vadd.f32 %v330, %v331
        %vm333 = vcmp.eq.f32.partialorder %v273, 1e+08
        %v334 = vsel %vm333, 0.0, %v332
        %335 = vst [vmem:[%s221 + $0x4] sm:$0x1] %v334
        %p336 = scmp.lt.s32.totalorder %s24, 1
        %s337 = scalar_select %p336, %s24, 1
        %p338 = scmp.lt.s32.totalorder %s23, 2
        %s339 = scalar_select %p338, %s23, 2
        %s340 = smul.addr %s337, 3
        %s341 = sadd.s32 %s339, %s340
        %s342 = smul.addr %s341, 8
        %s343 = scalar_lea.vmem %s2, %s342
        // Predicated region
        $region37: #{tpu_custom_call.1} parent=27 // pred_check
          %p344 = pneg %p103
        $region38: #{tpu_custom_call.1} parent=27 // pred_check_branch
          %346 = sbr.rel (%p344) target = $region40
        $region39: #{tpu_custom_call.1} parent=27 // pred_region
          _
        $region40: #{tpu_custom_call.1} parent=27 // pred_fallthru
          _
      $region28: #{tpu_custom_call.1} parent=5 // pred_fallthru
        _
      %p347 = scmp.le.s32.totalorder 2, %s14
      // Predicated region
      $region41: #{tpu_custom_call.1} parent=5 // pred_check
        %p348 = pneg %p347
      $region42: #{tpu_custom_call.1} parent=5 // pred_check_branch
        %350 = sbr.rel (%p348) target = $region44
      $region43: #{tpu_custom_call.1} parent=5 // pred_region
        %s351 = ssub.s32 %s14, 2
        // Predicated region
        $region45: #{tpu_custom_call.1} parent=43 // pred_check
          %p352 = pneg %p109
        $region46: #{tpu_custom_call.1} parent=43 // pred_check_branch
          %354 = sbr.rel (%p352) target = $region48
        $region47: #{tpu_custom_call.1} parent=43 // pred_region
          %p355 = scmp.lt.s32.totalorder %s26, 1
          %s356 = scalar_select %p355, %s26, 1
          %p357 = scmp.lt.s32.totalorder %s25, 2
          %s358 = scalar_select %p357, %s25, 2
          %s359 = smul.addr %s356, 3
          %s360 = sadd.s32 %s358, %s359
          %s361 = smul.addr %s360, 8
          %s362 = scalar_lea.vmem %s2, %s361
        $region48: #{tpu_custom_call.1} parent=43 // pred_fallthru
          _
      $region44: #{tpu_custom_call.1} parent=5 // pred_fallthru
        _
    $region6: #{tpu_custom_call.1} parent=1 // loop_footer
      %s18 = sadd.s32 1, %s14
    $region7: #{tpu_custom_call.1} parent=1 // loop_footer_branch
      %13 = sbr.rel target = $region3
    $region8: #{tpu_custom_call.1} parent=1 // loop_exit
      _
    %363 = vsyncpa [#allocation3], 1
    %s364 = scalar_lea.sflag [#allocation3], 1
    %365 = vsyncpa %s364, 1
    %366 = vsyncpa [#allocation5], 1
    %s367 = scalar_lea.sflag [#allocation5], 1
    %368 = vsyncpa %s367, 1

</llo_original>
